<compile_context>
chip_gen: v7x
topology: tpu7x:2x2x1
jax: 0.10.0
libtpu: 0.0.40
codegen_flags: <defaults>
</compile_context>

<pallas_src>
import functools

import jax
import jax.numpy as jnp
import numpy as np
from jax import lax
from jax.experimental import pallas as pl
from jax.experimental.pallas import tpu as pltpu


# ----------------------------------------------------------------------------
# Kernel: one block of `nb` batch elements per grid step.
# ----------------------------------------------------------------------------
def duan_kernel(x_ref, c_ref, w1_ref, b1_ref, w2_ref, b2_ref,
                m1t_ref, mb1_ref, m2g_ref, mb2g_ref, m2b_ref, mb2b_ref,
                y_ref, *, k, eps, act_dtype):
    nb, C, L = x_ref.shape
    inv_L = 1.0 / L
    mxu_dtype = w1_ref.dtype          # bf16 by default (fast MXU path)

    # Resident weights: load once, reuse for every batch element in the block.
    w1 = w1_ref[...]                  # [H, C]  (mxu_dtype)
    b1 = b1_ref[...]                  # [H, 1]  f32
    w2 = w2_ref[...]                  # [C, H]  (mxu_dtype)
    b2 = b2_ref[...]                  # [C, 1]  f32
    m1t = m1t_ref[...]                # [C, H]  f32 (mlp layer-1, transposed)
    mb1 = mb1_ref[...]                # [1, H]  f32
    m2g = m2g_ref[...]                # [C, H]  f32 (gamma rows of mlp layer-2)
    mb2g = mb2g_ref[...]              # [C, 1]  f32
    m2b = m2b_ref[...]                # [C, H]  f32 (beta rows)
    mb2b = mb2b_ref[...]              # [C, 1]  f32

    # Iotas for the rank predicate, shared by all batch elements in the block.
    ii = lax.broadcasted_iota(jnp.int32, (C, C), 0)
    jj = lax.broadcasted_iota(jnp.int32, (C, C), 1)

    # nb is static and capped small (<= 8) in the wrapper; plain unrolled loop.
    for b in range(nb):
        x = x_ref[b].astype(jnp.float32)      # [C, L]
        c = c_ref[b].astype(jnp.float32)      # [C, L]

        # ---- per-channel stats (centered two-pass: numerically stable) ----
        mu_c = jnp.sum(x, axis=1, keepdims=True) * inv_L          # [C,1]
        d = x - mu_c
        var_c = jnp.sum(d * d, axis=1, keepdims=True) * inv_L
        sigma_c = jnp.sqrt(var_c + eps)

        # ---- per-layer stats via exact decomposition (no 2nd [C,L] pass) ----
        mu_l = jnp.mean(mu_c, axis=0, keepdims=True)              # [1,1]
        var_l = jnp.mean(var_c + (mu_c - mu_l) ** 2, axis=0, keepdims=True)
        sigma_l = jnp.sqrt(var_l + eps)

        # ---- gate branch: two lane-dense MXU matmuls (bf16 operands) ----
        z = jnp.maximum(
            jnp.dot(w1, c.astype(mxu_dtype),
                    preferred_element_type=jnp.float32) + b1, 0.0)   # [H, L]
        gate_pre = jnp.dot(w2, z.astype(mxu_dtype),
                           preferred_element_type=jnp.float32) + b2  # [C, L]
        # sigmoid in act_dtype (bf16 on v6e/v7x doubles EUP throughput; pass
        # float32 on v5e or for exact validation).
        g = jax.nn.sigmoid(gate_pre.astype(act_dtype)).astype(jnp.float32)
        g_mix = jnp.sum(g, axis=1, keepdims=True) * inv_L            # [C,1]

        mu = g_mix * mu_c + (1.0 - g_mix) * mu_l
        sigma = g_mix * sigma_c + (1.0 - g_mix) * sigma_l
        # Approx EUP reciprocal of the tiny [C,1] sigma + 1 Newton step
        # (restores ~f32 accuracy; both are essentially free at [C,1]).
        inv0 = pl.reciprocal(sigma, approx=True)
        inv_sigma = inv0 * (2.0 - sigma * inv0)
        x_hat = (x - mu) * inv_sigma                                 # [C, L]

        # ---- mlp branch on the pooled condition (tiny; VPU + row reduce) ----
        cbar = jnp.sum(c, axis=1, keepdims=True) * inv_L             # [C,1]
        h = jnp.maximum(
            jnp.sum(m1t * cbar, axis=0, keepdims=True) + mb1, 0.0)   # [1,H]
        gamma = jnp.sum(m2g * h, axis=1, keepdims=True) + mb2g       # [C,1]
        beta = jnp.sum(m2b * h, axis=1, keepdims=True) + mb2b        # [C,1]
        y = (1.0 + gamma) * x_hat + beta                             # [C, L]

        # ---- exact top-k channel mask (stable-by-index rank predicate) ----
        # NOTE: O(C^2); for C >= ~1k switch to a threshold on the [1,C]
        # importance row to avoid the quadratic temporary.
        imp = jnp.sum(jnp.abs(y), axis=1, keepdims=True) * inv_L     # [C,1]
        imp_row = imp.T                                              # [1,C]
        gt = imp_row > imp                                           # imp[j] > imp[i]
        eq = imp_row == imp
        keep_before = jnp.logical_or(gt, jnp.logical_and(eq, jj < ii))
        rank = jnp.sum(keep_before.astype(jnp.int32), axis=1, keepdims=True)
        mask = (rank < k).astype(jnp.float32)                        # [C,1]

        y_ref[b] = (y * mask).astype(y_ref.dtype)


# ----------------------------------------------------------------------------
# Wrapper
# ----------------------------------------------------------------------------
def _vmem_capacity_bytes():
    """Physical per-core VMEM (v5e/v6e: 128 MiB, v7x: 64 MiB) with fallback."""
    try:
        info = pltpu.get_tpu_info()
        cap = getattr(info, "vmem_capacity_bytes", None)
        if cap:
            return int(cap)
    except Exception:
        pass
    return 64 << 20  # most conservative (v7x)


def _pick_batch_block(B, C, L, budget_bytes=8 << 20):
    """Batch elements per grid step: amortize per-step overhead when C*L is
    small, keep the double-buffered x/c/y blocks under a modest VMEM budget,
    cap the unrolled inner loop, and require nb | B (no partial blocks)."""
    per = 2 * 3 * C * L * 4            # double-buffered x, c, y (f32)
    nb = max(1, min(B, 8, budget_bytes // max(per, 1)))
    while B % nb:
        nb -= 1
    return max(1, nb)


def duan_forward(x, c, params, keep_ratio=0.7, eps=1e-5,
                 compute_dtype=jnp.bfloat16):
    B, C, L = x.shape
    H = params['w1'].shape[0]
    k = max(1, int(C * keep_ratio))
    f32 = jnp.float32

    # Weight prep (once, outside the kernel).  Gate weights in compute_dtype
    # (bf16 default -> fast MXU); the pooled-mlp path stays f32 (it is tiny
    # and feeds gamma/beta directly).
    w1 = params['w1'].astype(compute_dtype)              # [H, C]
    w2 = params['w2'].astype(compute_dtype)              # [C, H]
    b1 = params['b1'].astype(f32).reshape(H, 1)
    b2 = params['b2'].astype(f32).reshape(C, 1)
    m1t = params['m1'].astype(f32).T                     # [C, H]
    mb1r = params['mb1'].astype(f32).reshape(1, H)       # [1, H]
    m2 = params['m2'].astype(f32)                        # [2C, H]
    mb2 = params['mb2'].astype(f32).reshape(2 * C, 1)
    m2g, m2b = m2[:C], m2[C:]                            # gamma / beta rows
    mb2g, mb2b = mb2[:C], mb2[C:]

    nb = _pick_batch_block(B, C, L)
    grid = (B // nb,)

    batch_spec = pl.BlockSpec((nb, C, L), lambda i: (i, 0, 0))
    resident = pl.BlockSpec(memory_space=pltpu.MemorySpace.VMEM)  # no 2x buffering
    in_specs = [batch_spec, batch_spec] + [resident] * 10
    out_spec = pl.BlockSpec((nb, C, L), lambda i: (i, 0, 0))

    # --- tight VMEM working-set estimate, clamped per-generation ---
    weights = [w1, b1, w2, b2, m1t, mb1r, m2g, mb2g, m2b, mb2b]
    weight_bytes = sum(int(a.size) * a.dtype.itemsize for a in weights)
    block_bytes = 2 * 3 * nb * C * L * x.dtype.itemsize   # double-buffered x/c/y
    temp_bytes = nb * 4 * (5 * C * L + 2 * H * L + 2 * C * C + 32 * C)
    need = weight_bytes + block_bytes + temp_bytes
    vmem_limit = int(min(0.7 * _vmem_capacity_bytes(),
                         max(need + (2 << 20), 16 << 20)))

    # Advisory cost estimate for XLA scheduling around the call.
    flops = int(B * (4 * H * C * L + 6 * C * H))
    transcendentals = int(B * (C * L + 3 * C + 2))
    bytes_accessed = int(3 * B * C * L * x.dtype.itemsize + weight_bytes)

    kernel = functools.partial(duan_kernel, k=k, eps=eps,
                               act_dtype=compute_dtype)

    # NOTE(v7x): with grid=(B//nb,) and a single small batch, one TensorCore
    # may idle; a second parallel axis over L tiles would need a split
    # stats/normalize structure (see TODO at top of file).
    return pl.pallas_call(
        kernel,
        out_shape=jax.ShapeDtypeStruct((B, C, L), x.dtype),
        grid=grid,
        in_specs=in_specs,
        out_specs=out_spec,
        compiler_params=pltpu.CompilerParams(
            dimension_semantics=("parallel",),
            vmem_limit_bytes=vmem_limit),
        cost_estimate=pl.CostEstimate(
            flops=flops,
            transcendentals=transcendentals,
            bytes_accessed=bytes_accessed),
    )(x, c, w1, b1, w2, b2, m1t, mb1r, m2g, mb2g, m2b, mb2b)


# ----------------------------------------------------------------------------
# Deterministic parameter init (Conv1d kernel_size=1 == channel matmul).
# ----------------------------------------------------------------------------
def init_params(key, C, H):
    ks = jax.random.split(key, 8)

    def u(k, shape, fan_in):
        bound = 1.0 / np.sqrt(fan_in)
        return jax.random.uniform(k, shape, jnp.float32, -bound, bound)

    return dict(
        w1=u(ks[0], (H, C), C),      b1=u(ks[1], (H, 1), C),
        w2=u(ks[2], (C, H), H),      b2=u(ks[3], (C, 1), H),
        m1=u(ks[4], (H, C), C),      mb1=u(ks[5], (H, 1), C),
        m2=u(ks[6], (2 * C, H), H),  mb2=u(ks[7], (2 * C, 1), H),
    )


# ----------------------------------------------------------------------------
# Pure-JAX reference (mirrors the PyTorch forward) for correctness checking.
# ----------------------------------------------------------------------------
def duan_reference(x, c, p, keep_ratio=0.7, eps=1e-5):
    B, C, L = x.shape
    hi = lax.Precision.HIGHEST
    mu_c = x.mean(2, keepdims=True)
    sigma_c = jnp.sqrt(((x - mu_c) ** 2).mean(2, keepdims=True) + eps)
    mu_l = x.mean((1, 2), keepdims=True)
    sigma_l = jnp.sqrt(((x - mu_l) ** 2).mean((1, 2), keepdims=True) + eps)
    z = jnp.maximum(jnp.einsum('hc,bcl->bhl', p['w1'], c, precision=hi)
                    + p['b1'], 0.0)
    g = jax.nn.sigmoid(jnp.einsum('ch,bhl->bcl', p['w2'], z, precision=hi)
                       + p['b2'])
    g_mix = g.mean(2, keepdims=True)
    mu = g_mix * mu_c + (1 - g_mix) * mu_l
    sigma = g_mix * sigma_c + (1 - g_mix) * sigma_l
    x_hat = (x - mu) / sigma
    cp = c.mean(2, keepdims=True)
    h = jnp.maximum(jnp.einsum('hc,bcz->bhz', p['m1'], cp, precision=hi)
                    + p['mb1'], 0.0)
    gb = jnp.einsum('gh,bhz->bgz', p['m2'], h, precision=hi) + p['mb2']
    gamma, beta = gb[:, :C], gb[:, C:]
    y = (1 + gamma) * x_hat + beta
    imp = jnp.abs(y).mean(2)
    k = max(1, int(C * keep_ratio))
    idx = jnp.argsort(-imp, axis=1)[:, :k]
    mask = jnp.zeros_like(imp).at[jnp.arange(B)[:, None], idx].set(1.0)
    return y * mask[:, :, None]


if __name__ == "__main__":
    B, C, L, H = 2, 4, 16, 32
    key = jax.random.PRNGKey(0)
    kx, kc, kp = jax.random.split(key, 3)
    x = jax.random.normal(kx, (B, C, L), jnp.float32)
    c = jax.random.normal(kc, (B, C, L), jnp.float32)
    params = init_params(kp, C, H)

    y_ref = duan_reference(x, c, params)

    # 1) f32 MXU path: validates the kernel semantics tightly.
    y32 = jax.block_until_ready(
        duan_forward(x, c, params, compute_dtype=jnp.float32))
    np.testing.assert_allclose(np.asarray(y32), np.asarray(y_ref),
                               rtol=2e-3, atol=1e-4)

    # 2) default fast path (bf16 MXU operands): smoke-run + sanity only, since
    #    bf16 rounding can legitimately flip a near-tied top-k channel.
    ybf = jax.block_until_ready(duan_forward(x, c, params))
    assert ybf.shape == (B, C, L) and np.all(np.isfinite(np.asarray(ybf)))

    print("KERNEL_OK")
</pallas_src>

<mosaic_0001>
module attributes {stable_mosaic.version = 11 : i64} {
  func.func @duan_kernel(%arg0: i32, %arg1: memref<2x4x16xf32, #tpu.memory_space<vmem>>, %arg2: memref<2x4x16xf32, #tpu.memory_space<vmem>>, %arg3: memref<32x4xf32, #tpu.memory_space<vmem>>, %arg4: memref<32x1xf32, #tpu.memory_space<vmem>>, %arg5: memref<4x32xf32, #tpu.memory_space<vmem>>, %arg6: memref<4x1xf32, #tpu.memory_space<vmem>>, %arg7: memref<4x32xf32, #tpu.memory_space<vmem>>, %arg8: memref<1x32xf32, #tpu.memory_space<vmem>>, %arg9: memref<4x32xf32, #tpu.memory_space<vmem>>, %arg10: memref<4x1xf32, #tpu.memory_space<vmem>>, %arg11: memref<4x32xf32, #tpu.memory_space<vmem>>, %arg12: memref<4x1xf32, #tpu.memory_space<vmem>>, %arg13: memref<2x4x16xf32, #tpu.memory_space<vmem>>) attributes {dimension_semantics = [#tpu.dimension_semantics<parallel>], iteration_bounds = array<i64: 1>, scalar_prefetch = 0 : i64, scratch_operands = 0 : i64, tpu.core_type = #tpu.core_type<tc>, window_params = [{transform_indices = @transform_0, window_bounds = array<i64: 2, 4, 16>}, {transform_indices = @transform_1, window_bounds = array<i64: 2, 4, 16>}, {pipeline_mode = #tpu.pipeline_mode<synchronous>, transform_indices = @transform_2, window_bounds = array<i64: 32, 4>}, {pipeline_mode = #tpu.pipeline_mode<synchronous>, transform_indices = @transform_3, window_bounds = array<i64: 32, 1>}, {pipeline_mode = #tpu.pipeline_mode<synchronous>, transform_indices = @transform_4, window_bounds = array<i64: 4, 32>}, {pipeline_mode = #tpu.pipeline_mode<synchronous>, transform_indices = @transform_5, window_bounds = array<i64: 4, 1>}, {pipeline_mode = #tpu.pipeline_mode<synchronous>, transform_indices = @transform_6, window_bounds = array<i64: 4, 32>}, {pipeline_mode = #tpu.pipeline_mode<synchronous>, transform_indices = @transform_7, window_bounds = array<i64: 1, 32>}, {pipeline_mode = #tpu.pipeline_mode<synchronous>, transform_indices = @transform_8, window_bounds = array<i64: 4, 32>}, {pipeline_mode = #tpu.pipeline_mode<synchronous>, transform_indices = @transform_9, window_bounds = array<i64: 4, 1>}, {pipeline_mode = #tpu.pipeline_mode<synchronous>, transform_indices = @transform_10, window_bounds = array<i64: 4, 32>}, {pipeline_mode = #tpu.pipeline_mode<synchronous>, transform_indices = @transform_11, window_bounds = array<i64: 4, 1>}, {transform_indices = @transform_12, window_bounds = array<i64: 2, 4, 16>}]} {
    %c0 = arith.constant 0 : index
    %c0_0 = arith.constant 0 : index
    %0 = vector.load %arg3[%c0, %c0_0] : memref<32x4xf32, #tpu.memory_space<vmem>>, vector<32x4xf32>
    %c0_1 = arith.constant 0 : index
    %c0_2 = arith.constant 0 : index
    %1 = vector.load %arg4[%c0_1, %c0_2] : memref<32x1xf32, #tpu.memory_space<vmem>>, vector<32x1xf32>
    %c0_3 = arith.constant 0 : index
    %c0_4 = arith.constant 0 : index
    %2 = vector.load %arg5[%c0_3, %c0_4] : memref<4x32xf32, #tpu.memory_space<vmem>>, vector<4x32xf32>
    %c0_5 = arith.constant 0 : index
    %c0_6 = arith.constant 0 : index
    %3 = vector.load %arg6[%c0_5, %c0_6] : memref<4x1xf32, #tpu.memory_space<vmem>>, vector<4x1xf32>
    %c0_7 = arith.constant 0 : index
    %c0_8 = arith.constant 0 : index
    %4 = vector.load %arg7[%c0_7, %c0_8] : memref<4x32xf32, #tpu.memory_space<vmem>>, vector<4x32xf32>
    %c0_9 = arith.constant 0 : index
    %c0_10 = arith.constant 0 : index
    %5 = vector.load %arg8[%c0_9, %c0_10] : memref<1x32xf32, #tpu.memory_space<vmem>>, vector<1x32xf32>
    %c0_11 = arith.constant 0 : index
    %c0_12 = arith.constant 0 : index
    %6 = vector.load %arg9[%c0_11, %c0_12] : memref<4x32xf32, #tpu.memory_space<vmem>>, vector<4x32xf32>
    %c0_13 = arith.constant 0 : index
    %c0_14 = arith.constant 0 : index
    %7 = vector.load %arg10[%c0_13, %c0_14] : memref<4x1xf32, #tpu.memory_space<vmem>>, vector<4x1xf32>
    %c0_15 = arith.constant 0 : index
    %c0_16 = arith.constant 0 : index
    %8 = vector.load %arg11[%c0_15, %c0_16] : memref<4x32xf32, #tpu.memory_space<vmem>>, vector<4x32xf32>
    %c0_17 = arith.constant 0 : index
    %c0_18 = arith.constant 0 : index
    %9 = vector.load %arg12[%c0_17, %c0_18] : memref<4x1xf32, #tpu.memory_space<vmem>>, vector<4x1xf32>
    %10 = tpu.iota {dimensions = array<i32: 0>} : vector<4x4xi32>
    %11 = tpu.iota {dimensions = array<i32: 1>} : vector<4x4xi32>
    %c0_19 = arith.constant 0 : index
    %c0_20 = arith.constant 0 : index
    %c0_21 = arith.constant 0 : index
    %12 = vector.load %arg1[%c0_19, %c0_20, %c0_21] : memref<2x4x16xf32, #tpu.memory_space<vmem>>, vector<1x4x16xf32>
    %13 = vector.shape_cast %12 : vector<1x4x16xf32> to vector<4x16xf32>
    %c0_22 = arith.constant 0 : index
    %c0_23 = arith.constant 0 : index
    %c0_24 = arith.constant 0 : index
    %14 = vector.load %arg2[%c0_22, %c0_23, %c0_24] : memref<2x4x16xf32, #tpu.memory_space<vmem>>, vector<1x4x16xf32>
    %15 = vector.shape_cast %14 : vector<1x4x16xf32> to vector<4x16xf32>
    %cst = arith.constant dense<0.000000e+00> : vector<4xf32>
    %16 = vector.multi_reduction <add>, %13, %cst [1] : vector<4x16xf32> to vector<4xf32>
    %17 = vector.shape_cast %16 : vector<4xf32> to vector<4x1xf32>
    %cst_25 = arith.constant 6.250000e-02 : f32
    %18 = vector.broadcast %cst_25 : f32 to vector<4x1xf32>
    %19 = arith.mulf %17, %18 : vector<4x1xf32>
    %20 = vector.broadcast %19 : vector<4x1xf32> to vector<4x16xf32>
    %21 = arith.subf %13, %20 : vector<4x16xf32>
    %22 = arith.mulf %21, %21 : vector<4x16xf32>
    %cst_26 = arith.constant dense<0.000000e+00> : vector<4xf32>
    %23 = vector.multi_reduction <add>, %22, %cst_26 [1] : vector<4x16xf32> to vector<4xf32>
    %24 = vector.shape_cast %23 : vector<4xf32> to vector<4x1xf32>
    %cst_27 = arith.constant 6.250000e-02 : f32
    %25 = vector.broadcast %cst_27 : f32 to vector<4x1xf32>
    %26 = arith.mulf %24, %25 : vector<4x1xf32>
    %cst_28 = arith.constant 9.99999974E-6 : f32
    %27 = vector.broadcast %cst_28 : f32 to vector<4x1xf32>
    %28 = arith.addf %26, %27 : vector<4x1xf32>
    %29 = math.sqrt %28 : vector<4x1xf32>
    %cst_29 = arith.constant dense<0.000000e+00> : vector<1xf32>
    %30 = vector.multi_reduction <add>, %19, %cst_29 [0] : vector<4x1xf32> to vector<1xf32>
    %31 = vector.shape_cast %30 : vector<1xf32> to vector<1x1xf32>
    %cst_30 = arith.constant 4.000000e+00 : f32
    %32 = vector.broadcast %cst_30 : f32 to vector<1x1xf32>
    %33 = arith.divf %31, %32 : vector<1x1xf32>
    %34 = vector.broadcast %33 : vector<1x1xf32> to vector<4x1xf32>
    %35 = arith.subf %19, %34 : vector<4x1xf32>
    %36 = arith.mulf %35, %35 : vector<4x1xf32>
    %37 = arith.addf %26, %36 : vector<4x1xf32>
    %cst_31 = arith.constant dense<0.000000e+00> : vector<1xf32>
    %38 = vector.multi_reduction <add>, %37, %cst_31 [0] : vector<4x1xf32> to vector<1xf32>
    %39 = vector.shape_cast %38 : vector<1xf32> to vector<1x1xf32>
    %cst_32 = arith.constant 4.000000e+00 : f32
    %40 = vector.broadcast %cst_32 : f32 to vector<1x1xf32>
    %41 = arith.divf %39, %40 : vector<1x1xf32>
    %cst_33 = arith.constant 9.99999974E-6 : f32
    %42 = vector.broadcast %cst_33 : f32 to vector<1x1xf32>
    %43 = arith.addf %41, %42 : vector<1x1xf32>
    %44 = math.sqrt %43 : vector<1x1xf32>
    %cst_34 = arith.constant dense<0.000000e+00> : vector<32x16xf32>
    %45 = tpu.matmul %0, %15, %cst_34 {dimension_numbers = #tpu.dot_dimension_numbers<[1], [0], [0], [1], [0, 0, 1, 1], [], []>} : vector<32x4xf32>, vector<4x16xf32>, vector<32x16xf32> -> vector<32x16xf32>
    %46 = vector.broadcast %1 : vector<32x1xf32> to vector<32x16xf32>
    %47 = arith.addf %45, %46 : vector<32x16xf32>
    %cst_35 = arith.constant 0.000000e+00 : f32
    %48 = vector.broadcast %cst_35 : f32 to vector<32x16xf32>
    %49 = arith.maximumf %47, %48 : vector<32x16xf32>
    %cst_36 = arith.constant dense<0.000000e+00> : vector<4x16xf32>
    %50 = tpu.matmul %2, %49, %cst_36 {dimension_numbers = #tpu.dot_dimension_numbers<[1], [0], [0], [1], [0, 0, 1, 1], [], []>} : vector<4x32xf32>, vector<32x16xf32>, vector<4x16xf32> -> vector<4x16xf32>
    %51 = vector.broadcast %3 : vector<4x1xf32> to vector<4x16xf32>
    %52 = arith.addf %50, %51 : vector<4x16xf32>
    %53 = arith.negf %52 : vector<4x16xf32>
    %54 = math.exp %53 : vector<4x16xf32>
    %cst_37 = arith.constant 1.000000e+00 : f32
    %55 = vector.broadcast %cst_37 : f32 to vector<4x16xf32>
    %56 = arith.addf %55, %54 : vector<4x16xf32>
    %57 = arith.divf %55, %56 : vector<4x16xf32>
    %cst_38 = arith.constant dense<0.000000e+00> : vector<4xf32>
    %58 = vector.multi_reduction <add>, %57, %cst_38 [1] : vector<4x16xf32> to vector<4xf32>
    %59 = vector.shape_cast %58 : vector<4xf32> to vector<4x1xf32>
    %cst_39 = arith.constant 6.250000e-02 : f32
    %60 = vector.broadcast %cst_39 : f32 to vector<4x1xf32>
    %61 = arith.mulf %59, %60 : vector<4x1xf32>
    %62 = arith.mulf %61, %19 : vector<4x1xf32>
    %cst_40 = arith.constant 1.000000e+00 : f32
    %63 = vector.broadcast %cst_40 : f32 to vector<4x1xf32>
    %64 = arith.subf %63, %61 : vector<4x1xf32>
    %65 = vector.broadcast %33 : vector<1x1xf32> to vector<4x1xf32>
    %66 = arith.mulf %64, %65 : vector<4x1xf32>
    %67 = arith.addf %62, %66 : vector<4x1xf32>
    %68 = arith.mulf %61, %29 : vector<4x1xf32>
    %cst_41 = arith.constant 1.000000e+00 : f32
    %69 = vector.broadcast %cst_41 : f32 to vector<4x1xf32>
    %70 = arith.subf %69, %61 : vector<4x1xf32>
    %71 = vector.broadcast %44 : vector<1x1xf32> to vector<4x1xf32>
    %72 = arith.mulf %70, %71 : vector<4x1xf32>
    %73 = arith.addf %68, %72 : vector<4x1xf32>
    %74 = tpu.reciprocal %73 {approx = true} : vector<4x1xf32> -> vector<4x1xf32>
    %75 = arith.mulf %73, %74 : vector<4x1xf32>
    %cst_42 = arith.constant 2.000000e+00 : f32
    %76 = vector.broadcast %cst_42 : f32 to vector<4x1xf32>
    %77 = arith.subf %76, %75 : vector<4x1xf32>
    %78 = arith.mulf %74, %77 : vector<4x1xf32>
    %79 = vector.broadcast %67 : vector<4x1xf32> to vector<4x16xf32>
    %80 = arith.subf %13, %79 : vector<4x16xf32>
    %81 = vector.broadcast %78 : vector<4x1xf32> to vector<4x16xf32>
    %82 = arith.mulf %80, %81 : vector<4x16xf32>
    %cst_43 = arith.constant dense<0.000000e+00> : vector<4xf32>
    %83 = vector.multi_reduction <add>, %15, %cst_43 [1] : vector<4x16xf32> to vector<4xf32>
    %84 = vector.shape_cast %83 : vector<4xf32> to vector<4x1xf32>
    %cst_44 = arith.constant 6.250000e-02 : f32
    %85 = vector.broadcast %cst_44 : f32 to vector<4x1xf32>
    %86 = arith.mulf %84, %85 : vector<4x1xf32>
    %87 = vector.broadcast %86 : vector<4x1xf32> to vector<4x32xf32>
    %88 = arith.mulf %4, %87 : vector<4x32xf32>
    %cst_45 = arith.constant dense<0.000000e+00> : vector<32xf32>
    %89 = vector.multi_reduction <add>, %88, %cst_45 [0] : vector<4x32xf32> to vector<32xf32>
    %90 = vector.shape_cast %89 : vector<32xf32> to vector<1x32xf32>
    %91 = arith.addf %90, %5 : vector<1x32xf32>
    %cst_46 = arith.constant 0.000000e+00 : f32
    %92 = vector.broadcast %cst_46 : f32 to vector<1x32xf32>
    %93 = arith.maximumf %91, %92 : vector<1x32xf32>
    %94 = vector.broadcast %93 : vector<1x32xf32> to vector<4x32xf32>
    %95 = arith.mulf %6, %94 : vector<4x32xf32>
    %cst_47 = arith.constant dense<0.000000e+00> : vector<4xf32>
    %96 = vector.multi_reduction <add>, %95, %cst_47 [1] : vector<4x32xf32> to vector<4xf32>
    %97 = vector.shape_cast %96 : vector<4xf32> to vector<4x1xf32>
    %98 = arith.addf %97, %7 : vector<4x1xf32>
    %99 = vector.broadcast %93 : vector<1x32xf32> to vector<4x32xf32>
    %100 = arith.mulf %8, %99 : vector<4x32xf32>
    %cst_48 = arith.constant dense<0.000000e+00> : vector<4xf32>
    %101 = vector.multi_reduction <add>, %100, %cst_48 [1] : vector<4x32xf32> to vector<4xf32>
    %102 = vector.shape_cast %101 : vector<4xf32> to vector<4x1xf32>
    %103 = arith.addf %102, %9 : vector<4x1xf32>
    %cst_49 = arith.constant 1.000000e+00 : f32
    %104 = vector.broadcast %cst_49 : f32 to vector<4x1xf32>
    %105 = arith.addf %104, %98 : vector<4x1xf32>
    %106 = vector.broadcast %105 : vector<4x1xf32> to vector<4x16xf32>
    %107 = arith.mulf %106, %82 : vector<4x16xf32>
    %108 = vector.broadcast %103 : vector<4x1xf32> to vector<4x16xf32>
    %109 = arith.addf %107, %108 : vector<4x16xf32>
    %110 = math.absf %109 : vector<4x16xf32>
    %cst_50 = arith.constant dense<0.000000e+00> : vector<4xf32>
    %111 = vector.multi_reduction <add>, %110, %cst_50 [1] : vector<4x16xf32> to vector<4xf32>
    %112 = vector.shape_cast %111 : vector<4xf32> to vector<4x1xf32>
    %cst_51 = arith.constant 6.250000e-02 : f32
    %113 = vector.broadcast %cst_51 : f32 to vector<4x1xf32>
    %114 = arith.mulf %112, %113 : vector<4x1xf32>
    %115 = tpu.transpose %114, [1, 0] : vector<4x1xf32> -> vector<1x4xf32>
    %116 = vector.broadcast %115 : vector<1x4xf32> to vector<4x4xf32>
    %117 = vector.broadcast %114 : vector<4x1xf32> to vector<4x4xf32>
    %118 = arith.cmpf ogt, %116, %117 : vector<4x4xf32>
    %119 = vector.broadcast %115 : vector<1x4xf32> to vector<4x4xf32>
    %120 = vector.broadcast %114 : vector<4x1xf32> to vector<4x4xf32>
    %121 = arith.cmpf oeq, %119, %120 : vector<4x4xf32>
    %122 = arith.cmpi slt, %11, %10 : vector<4x4xi32>
    %123 = arith.andi %121, %122 : vector<4x4xi1>
    %124 = arith.ori %118, %123 : vector<4x4xi1>
    %125 = arith.extui %124 : vector<4x4xi1> to vector<4x4xi32>
    %cst_52 = arith.constant dense<0> : vector<4xi32>
    %126 = vector.multi_reduction <add>, %125, %cst_52 [1] : vector<4x4xi32> to vector<4xi32>
    %127 = vector.shape_cast %126 : vector<4xi32> to vector<4x1xi32>
    %c2_i32 = arith.constant 2 : i32
    %128 = vector.broadcast %c2_i32 : i32 to vector<4x1xi32>
    %129 = arith.cmpi slt, %127, %128 : vector<4x1xi32>
    %130 = arith.extui %129 : vector<4x1xi1> to vector<4x1xi32>
    %131 = arith.sitofp %130 : vector<4x1xi32> to vector<4x1xf32>
    %132 = vector.broadcast %131 : vector<4x1xf32> to vector<4x16xf32>
    %133 = arith.mulf %109, %132 : vector<4x16xf32>
    %c0_53 = arith.constant 0 : index
    %c0_54 = arith.constant 0 : index
    %c0_55 = arith.constant 0 : index
    %134 = vector.load %arg13[%c0_53, %c0_54, %c0_55] : memref<2x4x16xf32, #tpu.memory_space<vmem>>, vector<1x4x16xf32>
    %135 = vector.shape_cast %134 : vector<1x4x16xf32> to vector<4x16xf32>
    %136 = vector.shape_cast %133 : vector<4x16xf32> to vector<1x4x16xf32>
    tpu.vector_store %arg13[%c0_53, %c0_54, %c0_55], %136 {strides = array<i32>} : memref<2x4x16xf32, #tpu.memory_space<vmem>>, vector<1x4x16xf32>,
    %c1 = arith.constant 1 : index
    %c0_56 = arith.constant 0 : index
    %c0_57 = arith.constant 0 : index
    %137 = vector.load %arg1[%c1, %c0_56, %c0_57] : memref<2x4x16xf32, #tpu.memory_space<vmem>>, vector<1x4x16xf32>
    %138 = vector.shape_cast %137 : vector<1x4x16xf32> to vector<4x16xf32>
    %c1_58 = arith.constant 1 : index
    %c0_59 = arith.constant 0 : index
    %c0_60 = arith.constant 0 : index
    %139 = vector.load %arg2[%c1_58, %c0_59, %c0_60] : memref<2x4x16xf32, #tpu.memory_space<vmem>>, vector<1x4x16xf32>
    %140 = vector.shape_cast %139 : vector<1x4x16xf32> to vector<4x16xf32>
    %cst_61 = arith.constant dense<0.000000e+00> : vector<4xf32>
    %141 = vector.multi_reduction <add>, %138, %cst_61 [1] : vector<4x16xf32> to vector<4xf32>
    %142 = vector.shape_cast %141 : vector<4xf32> to vector<4x1xf32>
    %cst_62 = arith.constant 6.250000e-02 : f32
    %143 = vector.broadcast %cst_62 : f32 to vector<4x1xf32>
    %144 = arith.mulf %142, %143 : vector<4x1xf32>
    %145 = vector.broadcast %144 : vector<4x1xf32> to vector<4x16xf32>
    %146 = arith.subf %138, %145 : vector<4x16xf32>
    %147 = arith.mulf %146, %146 : vector<4x16xf32>
    %cst_63 = arith.constant dense<0.000000e+00> : vector<4xf32>
    %148 = vector.multi_reduction <add>, %147, %cst_63 [1] : vector<4x16xf32> to vector<4xf32>
    %149 = vector.shape_cast %148 : vector<4xf32> to vector<4x1xf32>
    %cst_64 = arith.constant 6.250000e-02 : f32
    %150 = vector.broadcast %cst_64 : f32 to vector<4x1xf32>
    %151 = arith.mulf %149, %150 : vector<4x1xf32>
    %cst_65 = arith.constant 9.99999974E-6 : f32
    %152 = vector.broadcast %cst_65 : f32 to vector<4x1xf32>
    %153 = arith.addf %151, %152 : vector<4x1xf32>
    %154 = math.sqrt %153 : vector<4x1xf32>
    %cst_66 = arith.constant dense<0.000000e+00> : vector<1xf32>
    %155 = vector.multi_reduction <add>, %144, %cst_66 [0] : vector<4x1xf32> to vector<1xf32>
    %156 = vector.shape_cast %155 : vector<1xf32> to vector<1x1xf32>
    %cst_67 = arith.constant 4.000000e+00 : f32
    %157 = vector.broadcast %cst_67 : f32 to vector<1x1xf32>
    %158 = arith.divf %156, %157 : vector<1x1xf32>
    %159 = vector.broadcast %158 : vector<1x1xf32> to vector<4x1xf32>
    %160 = arith.subf %144, %159 : vector<4x1xf32>
    %161 = arith.mulf %160, %160 : vector<4x1xf32>
    %162 = arith.addf %151, %161 : vector<4x1xf32>
    %cst_68 = arith.constant dense<0.000000e+00> : vector<1xf32>
    %163 = vector.multi_reduction <add>, %162, %cst_68 [0] : vector<4x1xf32> to vector<1xf32>
    %164 = vector.shape_cast %163 : vector<1xf32> to vector<1x1xf32>
    %cst_69 = arith.constant 4.000000e+00 : f32
    %165 = vector.broadcast %cst_69 : f32 to vector<1x1xf32>
    %166 = arith.divf %164, %165 : vector<1x1xf32>
    %cst_70 = arith.constant 9.99999974E-6 : f32
    %167 = vector.broadcast %cst_70 : f32 to vector<1x1xf32>
    %168 = arith.addf %166, %167 : vector<1x1xf32>
    %169 = math.sqrt %168 : vector<1x1xf32>
    %cst_71 = arith.constant dense<0.000000e+00> : vector<32x16xf32>
    %170 = tpu.matmul %0, %140, %cst_71 {dimension_numbers = #tpu.dot_dimension_numbers<[1], [0], [0], [1], [0, 0, 1, 1], [], []>} : vector<32x4xf32>, vector<4x16xf32>, vector<32x16xf32> -> vector<32x16xf32>
    %171 = vector.broadcast %1 : vector<32x1xf32> to vector<32x16xf32>
    %172 = arith.addf %170, %171 : vector<32x16xf32>
    %cst_72 = arith.constant 0.000000e+00 : f32
    %173 = vector.broadcast %cst_72 : f32 to vector<32x16xf32>
    %174 = arith.maximumf %172, %173 : vector<32x16xf32>
    %cst_73 = arith.constant dense<0.000000e+00> : vector<4x16xf32>
    %175 = tpu.matmul %2, %174, %cst_73 {dimension_numbers = #tpu.dot_dimension_numbers<[1], [0], [0], [1], [0, 0, 1, 1], [], []>} : vector<4x32xf32>, vector<32x16xf32>, vector<4x16xf32> -> vector<4x16xf32>
    %176 = vector.broadcast %3 : vector<4x1xf32> to vector<4x16xf32>
    %177 = arith.addf %175, %176 : vector<4x16xf32>
    %178 = arith.negf %177 : vector<4x16xf32>
    %179 = math.exp %178 : vector<4x16xf32>
    %cst_74 = arith.constant 1.000000e+00 : f32
    %180 = vector.broadcast %cst_74 : f32 to vector<4x16xf32>
    %181 = arith.addf %180, %179 : vector<4x16xf32>
    %182 = arith.divf %180, %181 : vector<4x16xf32>
    %cst_75 = arith.constant dense<0.000000e+00> : vector<4xf32>
    %183 = vector.multi_reduction <add>, %182, %cst_75 [1] : vector<4x16xf32> to vector<4xf32>
    %184 = vector.shape_cast %183 : vector<4xf32> to vector<4x1xf32>
    %cst_76 = arith.constant 6.250000e-02 : f32
    %185 = vector.broadcast %cst_76 : f32 to vector<4x1xf32>
    %186 = arith.mulf %184, %185 : vector<4x1xf32>
    %187 = arith.mulf %186, %144 : vector<4x1xf32>
    %cst_77 = arith.constant 1.000000e+00 : f32
    %188 = vector.broadcast %cst_77 : f32 to vector<4x1xf32>
    %189 = arith.subf %188, %186 : vector<4x1xf32>
    %190 = vector.broadcast %158 : vector<1x1xf32> to vector<4x1xf32>
    %191 = arith.mulf %189, %190 : vector<4x1xf32>
    %192 = arith.addf %187, %191 : vector<4x1xf32>
    %193 = arith.mulf %186, %154 : vector<4x1xf32>
    %cst_78 = arith.constant 1.000000e+00 : f32
    %194 = vector.broadcast %cst_78 : f32 to vector<4x1xf32>
    %195 = arith.subf %194, %186 : vector<4x1xf32>
    %196 = vector.broadcast %169 : vector<1x1xf32> to vector<4x1xf32>
    %197 = arith.mulf %195, %196 : vector<4x1xf32>
    %198 = arith.addf %193, %197 : vector<4x1xf32>
    %199 = tpu.reciprocal %198 {approx = true} : vector<4x1xf32> -> vector<4x1xf32>
    %200 = arith.mulf %198, %199 : vector<4x1xf32>
    %cst_79 = arith.constant 2.000000e+00 : f32
    %201 = vector.broadcast %cst_79 : f32 to vector<4x1xf32>
    %202 = arith.subf %201, %200 : vector<4x1xf32>
    %203 = arith.mulf %199, %202 : vector<4x1xf32>
    %204 = vector.broadcast %192 : vector<4x1xf32> to vector<4x16xf32>
    %205 = arith.subf %138, %204 : vector<4x16xf32>
    %206 = vector.broadcast %203 : vector<4x1xf32> to vector<4x16xf32>
    %207 = arith.mulf %205, %206 : vector<4x16xf32>
    %cst_80 = arith.constant dense<0.000000e+00> : vector<4xf32>
    %208 = vector.multi_reduction <add>, %140, %cst_80 [1] : vector<4x16xf32> to vector<4xf32>
    %209 = vector.shape_cast %208 : vector<4xf32> to vector<4x1xf32>
    %cst_81 = arith.constant 6.250000e-02 : f32
    %210 = vector.broadcast %cst_81 : f32 to vector<4x1xf32>
    %211 = arith.mulf %209, %210 : vector<4x1xf32>
    %212 = vector.broadcast %211 : vector<4x1xf32> to vector<4x32xf32>
    %213 = arith.mulf %4, %212 : vector<4x32xf32>
    %cst_82 = arith.constant dense<0.000000e+00> : vector<32xf32>
    %214 = vector.multi_reduction <add>, %213, %cst_82 [0] : vector<4x32xf32> to vector<32xf32>
    %215 = vector.shape_cast %214 : vector<32xf32> to vector<1x32xf32>
    %216 = arith.addf %215, %5 : vector<1x32xf32>
    %cst_83 = arith.constant 0.000000e+00 : f32
    %217 = vector.broadcast %cst_83 : f32 to vector<1x32xf32>
    %218 = arith.maximumf %216, %217 : vector<1x32xf32>
    %219 = vector.broadcast %218 : vector<1x32xf32> to vector<4x32xf32>
    %220 = arith.mulf %6, %219 : vector<4x32xf32>
    %cst_84 = arith.constant dense<0.000000e+00> : vector<4xf32>
    %221 = vector.multi_reduction <add>, %220, %cst_84 [1] : vector<4x32xf32> to vector<4xf32>
    %222 = vector.shape_cast %221 : vector<4xf32> to vector<4x1xf32>
    %223 = arith.addf %222, %7 : vector<4x1xf32>
    %224 = vector.broadcast %218 : vector<1x32xf32> to vector<4x32xf32>
    %225 = arith.mulf %8, %224 : vector<4x32xf32>
    %cst_85 = arith.constant dense<0.000000e+00> : vector<4xf32>
    %226 = vector.multi_reduction <add>, %225, %cst_85 [1] : vector<4x32xf32> to vector<4xf32>
    %227 = vector.shape_cast %226 : vector<4xf32> to vector<4x1xf32>
    %228 = arith.addf %227, %9 : vector<4x1xf32>
    %cst_86 = arith.constant 1.000000e+00 : f32
    %229 = vector.broadcast %cst_86 : f32 to vector<4x1xf32>
    %230 = arith.addf %229, %223 : vector<4x1xf32>
    %231 = vector.broadcast %230 : vector<4x1xf32> to vector<4x16xf32>
    %232 = arith.mulf %231, %207 : vector<4x16xf32>
    %233 = vector.broadcast %228 : vector<4x1xf32> to vector<4x16xf32>
    %234 = arith.addf %232, %233 : vector<4x16xf32>
    %235 = math.absf %234 : vector<4x16xf32>
    %cst_87 = arith.constant dense<0.000000e+00> : vector<4xf32>
    %236 = vector.multi_reduction <add>, %235, %cst_87 [1] : vector<4x16xf32> to vector<4xf32>
    %237 = vector.shape_cast %236 : vector<4xf32> to vector<4x1xf32>
    %cst_88 = arith.constant 6.250000e-02 : f32
    %238 = vector.broadcast %cst_88 : f32 to vector<4x1xf32>
    %239 = arith.mulf %237, %238 : vector<4x1xf32>
    %240 = tpu.transpose %239, [1, 0] : vector<4x1xf32> -> vector<1x4xf32>
    %241 = vector.broadcast %240 : vector<1x4xf32> to vector<4x4xf32>
    %242 = vector.broadcast %239 : vector<4x1xf32> to vector<4x4xf32>
    %243 = arith.cmpf ogt, %241, %242 : vector<4x4xf32>
    %244 = vector.broadcast %240 : vector<1x4xf32> to vector<4x4xf32>
    %245 = vector.broadcast %239 : vector<4x1xf32> to vector<4x4xf32>
    %246 = arith.cmpf oeq, %244, %245 : vector<4x4xf32>
    %247 = arith.cmpi slt, %11, %10 : vector<4x4xi32>
    %248 = arith.andi %246, %247 : vector<4x4xi1>
    %249 = arith.ori %243, %248 : vector<4x4xi1>
    %250 = arith.extui %249 : vector<4x4xi1> to vector<4x4xi32>
    %cst_89 = arith.constant dense<0> : vector<4xi32>
    %251 = vector.multi_reduction <add>, %250, %cst_89 [1] : vector<4x4xi32> to vector<4xi32>
    %252 = vector.shape_cast %251 : vector<4xi32> to vector<4x1xi32>
    %c2_i32_90 = arith.constant 2 : i32
    %253 = vector.broadcast %c2_i32_90 : i32 to vector<4x1xi32>
    %254 = arith.cmpi slt, %252, %253 : vector<4x1xi32>
    %255 = arith.extui %254 : vector<4x1xi1> to vector<4x1xi32>
    %256 = arith.sitofp %255 : vector<4x1xi32> to vector<4x1xf32>
    %257 = vector.broadcast %256 : vector<4x1xf32> to vector<4x16xf32>
    %258 = arith.mulf %234, %257 : vector<4x16xf32>
    %c1_91 = arith.constant 1 : index
    %c0_92 = arith.constant 0 : index
    %c0_93 = arith.constant 0 : index
    %259 = vector.load %arg13[%c1_91, %c0_92, %c0_93] : memref<2x4x16xf32, #tpu.memory_space<vmem>>, vector<1x4x16xf32>
    %260 = vector.shape_cast %259 : vector<1x4x16xf32> to vector<4x16xf32>
    %261 = vector.shape_cast %258 : vector<4x16xf32> to vector<1x4x16xf32>
    tpu.vector_store %arg13[%c1_91, %c0_92, %c0_93], %261 {strides = array<i32>} : memref<2x4x16xf32, #tpu.memory_space<vmem>>, vector<1x4x16xf32>,
    return
  }
  func.func @transform_0(%arg0: i32) -> (i32, i32, i32) {
    %c0_i32 = arith.constant 0 : i32
    %c0_i32_0 = arith.constant 0 : i32
    %c0_i32_1 = arith.constant 0 : i32
    return %arg0, %c0_i32, %c0_i32_0 : i32, i32, i32
  }
  func.func @transform_1(%arg0: i32) -> (i32, i32, i32) {
    %c0_i32 = arith.constant 0 : i32
    %c0_i32_0 = arith.constant 0 : i32
    %c0_i32_1 = arith.constant 0 : i32
    return %arg0, %c0_i32, %c0_i32_0 : i32, i32, i32
  }
  func.func @transform_2(%arg0: i32) -> (i32, i32) {
    %c0_i32 = arith.constant 0 : i32
    %c0_i32_0 = arith.constant 0 : i32
    %c0_i32_1 = arith.constant 0 : i32
    return %c0_i32, %c0_i32_0 : i32, i32
  }
  func.func @transform_3(%arg0: i32) -> (i32, i32) {
    %c0_i32 = arith.constant 0 : i32
    %c0_i32_0 = arith.constant 0 : i32
    %c0_i32_1 = arith.constant 0 : i32
    return %c0_i32, %c0_i32_0 : i32, i32
  }
  func.func @transform_4(%arg0: i32) -> (i32, i32) {
    %c0_i32 = arith.constant 0 : i32
    %c0_i32_0 = arith.constant 0 : i32
    %c0_i32_1 = arith.constant 0 : i32
    return %c0_i32, %c0_i32_0 : i32, i32
  }
  func.func @transform_5(%arg0: i32) -> (i32, i32) {
    %c0_i32 = arith.constant 0 : i32
    %c0_i32_0 = arith.constant 0 : i32
    %c0_i32_1 = arith.constant 0 : i32
    return %c0_i32, %c0_i32_0 : i32, i32
  }
  func.func @transform_6(%arg0: i32) -> (i32, i32) {
    %c0_i32 = arith.constant 0 : i32
    %c0_i32_0 = arith.constant 0 : i32
    %c0_i32_1 = arith.constant 0 : i32
    return %c0_i32, %c0_i32_0 : i32, i32
  }
  func.func @transform_7(%arg0: i32) -> (i32, i32) {
    %c0_i32 = arith.constant 0 : i32
    %c0_i32_0 = arith.constant 0 : i32
    %c0_i32_1 = arith.constant 0 : i32
    return %c0_i32, %c0_i32_0 : i32, i32
  }
  func.func @transform_8(%arg0: i32) -> (i32, i32) {
    %c0_i32 = arith.constant 0 : i32
    %c0_i32_0 = arith.constant 0 : i32
    %c0_i32_1 = arith.constant 0 : i32
    return %c0_i32, %c0_i32_0 : i32, i32
  }
  func.func @transform_9(%arg0: i32) -> (i32, i32) {
    %c0_i32 = arith.constant 0 : i32
    %c0_i32_0 = arith.constant 0 : i32
    %c0_i32_1 = arith.constant 0 : i32
    return %c0_i32, %c0_i32_0 : i32, i32
  }
  func.func @transform_10(%arg0: i32) -> (i32, i32) {
    %c0_i32 = arith.constant 0 : i32
    %c0_i32_0 = arith.constant 0 : i32
    %c0_i32_1 = arith.constant 0 : i32
    return %c0_i32, %c0_i32_0 : i32, i32
  }
  func.func @transform_11(%arg0: i32) -> (i32, i32) {
    %c0_i32 = arith.constant 0 : i32
    %c0_i32_0 = arith.constant 0 : i32
    %c0_i32_1 = arith.constant 0 : i32
    return %c0_i32, %c0_i32_0 : i32, i32
  }
  func.func @transform_12(%arg0: i32) -> (i32, i32, i32) {
    %c0_i32 = arith.constant 0 : i32
    %c0_i32_0 = arith.constant 0 : i32
    %c0_i32_1 = arith.constant 0 : i32
    return %arg0, %c0_i32, %c0_i32_0 : i32, i32, i32
  }
}

</mosaic_0001>

<llo_original>
// kernel: tpu_custom_call.1
$region0: #{tpu_custom_call.1}
  #allocation0 [shape = 'u32[]', space=smem, size = 0x4, offset = 0x4, fixed_abs, tag = 'smem constant byte address 0x4 - core index']
  #allocation1 [shape = 'u32[144,128]{1,0:T(1,128)}', space=vmem, size = 0x12000, scoped, tag = 'internal scratch']
  %s0 = inlined_call_operand.vmem [shape: f32[2,4,16], index: 0, kind: input, shape index: {}]
  %s1 = inlined_call_operand.vmem [shape: f32[2,4,16], index: 1, kind: input, shape index: {}]
  %s2 = inlined_call_operand.vmem [shape: f32[32,4], index: 2, kind: input, shape index: {}]
  %s3 = inlined_call_operand.vmem [shape: f32[32,1], index: 3, kind: input, shape index: {}]
  %s4 = inlined_call_operand.vmem [shape: f32[4,32], index: 4, kind: input, shape index: {}]
  %s5 = inlined_call_operand.vmem [shape: f32[4,1], index: 5, kind: input, shape index: {}]
  %s6 = inlined_call_operand.vmem [shape: f32[4,32], index: 6, kind: input, shape index: {}]
  %s7 = inlined_call_operand.vmem [shape: f32[1,32], index: 7, kind: input, shape index: {}]
  %s8 = inlined_call_operand.vmem [shape: f32[4,32], index: 8, kind: input, shape index: {}]
  %s9 = inlined_call_operand.vmem [shape: f32[4,1], index: 9, kind: input, shape index: {}]
  %s10 = inlined_call_operand.vmem [shape: f32[4,32], index: 10, kind: input, shape index: {}]
  %s11 = inlined_call_operand.vmem [shape: f32[4,1], index: 11, kind: input, shape index: {}]
  %s12 = inlined_call_operand.hbm [shape: f32[2,4,16], index: 12, kind: output, shape index: {}]
  %s13 = sld [smem:[#allocation0]]
  $region58: #{tpu_custom_call.1} parent=0
    _
  %s15 = ssub.s32 1, %s13
  %s16 = scalar_select 0, %s15, %s13
  $region1: #{tpu_custom_call.1} parent=0
    #allocation2 [shape = 'u8[4096]{0}', space=vmem, size = 0x1000, scoped, tag = 'output window, operand 0, single buffered']
    #allocation3 [shape = 's32[1]{0}', space=sflag, size = 0x4, scoped, tag = 'scoped memory for tpu_custom_call.1']
    %17 = vsyncpa [#allocation3], 0
    // Predicated region
    $region2: #{tpu_custom_call.1} parent=1 // pred_check
      _
    $region3: #{tpu_custom_call.1} parent=1 // pred_check_branch
      %19 = sbr.rel (0) target = $region5
    $region4: #{tpu_custom_call.1} parent=1 // pred_region
      _
    $region5: #{tpu_custom_call.1} parent=1 // pred_fallthru
      _
    // Predicated region
    $region6: #{tpu_custom_call.1} parent=1 // pred_check
      _
    $region7: #{tpu_custom_call.1} parent=1 // pred_check_branch
      %21 = sbr.rel (0) target = $region9
    $region8: #{tpu_custom_call.1} parent=1 // pred_region
      _
    $region9: #{tpu_custom_call.1} parent=1 // pred_fallthru
      _
    // Predicated region
    $region10: #{tpu_custom_call.1} parent=1 // pred_check
      _
    $region11: #{tpu_custom_call.1} parent=1 // pred_check_branch
      %23 = sbr.rel (0) target = $region13
    $region12: #{tpu_custom_call.1} parent=1 // pred_region
      _
    $region13: #{tpu_custom_call.1} parent=1 // pred_fallthru
      _
    // Predicated region
    $region14: #{tpu_custom_call.1} parent=1 // pred_check
      _
    $region15: #{tpu_custom_call.1} parent=1 // pred_check_branch
      %25 = sbr.rel (0) target = $region17
    $region16: #{tpu_custom_call.1} parent=1 // pred_region
      _
    $region17: #{tpu_custom_call.1} parent=1 // pred_fallthru
      _
    // Predicated region
    $region18: #{tpu_custom_call.1} parent=1 // pred_check
      _
    $region19: #{tpu_custom_call.1} parent=1 // pred_check_branch
      %27 = sbr.rel (0) target = $region21
    $region20: #{tpu_custom_call.1} parent=1 // pred_region
      _
    $region21: #{tpu_custom_call.1} parent=1 // pred_fallthru
      _
    // Predicated region
    $region22: #{tpu_custom_call.1} parent=1 // pred_check
      _
    $region23: #{tpu_custom_call.1} parent=1 // pred_check_branch
      %29 = sbr.rel (0) target = $region25
    $region24: #{tpu_custom_call.1} parent=1 // pred_region
      _
    $region25: #{tpu_custom_call.1} parent=1 // pred_fallthru
      _
    // Predicated region
    $region26: #{tpu_custom_call.1} parent=1 // pred_check
      _
    $region27: #{tpu_custom_call.1} parent=1 // pred_check_branch
      %31 = sbr.rel (0) target = $region29
    $region28: #{tpu_custom_call.1} parent=1 // pred_region
      _
    $region29: #{tpu_custom_call.1} parent=1 // pred_fallthru
      _
    // Predicated region
    $region30: #{tpu_custom_call.1} parent=1 // pred_check
      _
    $region31: #{tpu_custom_call.1} parent=1 // pred_check_branch
      %33 = sbr.rel (0) target = $region33
    $region32: #{tpu_custom_call.1} parent=1 // pred_region
      _
    $region33: #{tpu_custom_call.1} parent=1 // pred_fallthru
      _
    // Predicated region
    $region34: #{tpu_custom_call.1} parent=1 // pred_check
      _
    $region35: #{tpu_custom_call.1} parent=1 // pred_check_branch
      %35 = sbr.rel (0) target = $region37
    $region36: #{tpu_custom_call.1} parent=1 // pred_region
      _
    $region37: #{tpu_custom_call.1} parent=1 // pred_fallthru
      _
    // Predicated region
    $region38: #{tpu_custom_call.1} parent=1 // pred_check
      _
    $region39: #{tpu_custom_call.1} parent=1 // pred_check_branch
      %37 = sbr.rel (0) target = $region41
    $region40: #{tpu_custom_call.1} parent=1 // pred_region
      _
    $region41: #{tpu_custom_call.1} parent=1 // pred_fallthru
      _
    // Predicated region
    $region42: #{tpu_custom_call.1} parent=1 // pred_check
      _
    $region43: #{tpu_custom_call.1} parent=1 // pred_check_branch
      %39 = sbr.rel (0) target = $region45
    $region44: #{tpu_custom_call.1} parent=1 // pred_region
      _
    $region45: #{tpu_custom_call.1} parent=1 // pred_fallthru
      _
    // Predicated region
    $region46: #{tpu_custom_call.1} parent=1 // pred_check
      _
    $region47: #{tpu_custom_call.1} parent=1 // pred_check_branch
      %41 = sbr.rel (0) target = $region49
    $region48: #{tpu_custom_call.1} parent=1 // pred_region
      _
    $region49: #{tpu_custom_call.1} parent=1 // pred_fallthru
      _
    %v42 = vld [vmem:[%s2] sm:$0xff]
    %v43 = vld [vmem:[%s2 + $0x8] sm:$0xff]
    %v44 = vld [vmem:[%s2 + $0x10] sm:$0xff]
    %v45 = vld [vmem:[%s2 + $0x18] sm:$0xff]
    %v46 = vld [vmem:[%s3] sm:$0xff]
    %v47 = vld [vmem:[%s3 + $0x8] sm:$0xff]
    %v48 = vld [vmem:[%s3 + $0x10] sm:$0xff]
    %v49 = vld [vmem:[%s3 + $0x18] sm:$0xff]
    %v50 = vld [vmem:[%s4] sm:$0xf]
    %v51 = vld [vmem:[%s5] sm:$0xf]
    %v52 = vld [vmem:[%s6] sm:$0xf]
    %v53 = vld [vmem:[%s7] sm:$0x1]
    %v54 = vld [vmem:[%s8] sm:$0xf]
    %v55 = vld [vmem:[%s9] sm:$0xf]
    %v56 = vld [vmem:[%s10] sm:$0xf]
    %v57 = vld [vmem:[%s11] sm:$0xf]
    %v58 = vlaneseq
    %v59 = vshrl.u32 %v58, 7
    %v60 = vlaneseq
    %v61 = vand.u32 %v60, 127
    %v62 = vld [vmem:[%s0] sm:$0xf]
    %v63 = vld [vmem:[%s1] sm:$0xf]
    %vm64 = vcmask 125952
    %v65 = vsel %vm64, %v62, 0.0
    %66 = vadd.xlane.f32.xlu0 %v65
    %v67 = vpop.xlane.xlu0 %66
    %v68 = vmul.f32 %v67, 0.0625
    %v69 = vsub.f32 %v62, %v68
    %v70 = vmul.f32 %v69, %v69
    %v71 = vsel %vm64, %v70, 0.0
    %72 = vadd.xlane.f32.xlu0 %v71
    %v73 = vpop.xlane.xlu0 %72
    %v74 = vmul.f32 %v73, 0.0625
    %v75 = vadd.f32 %v74, 1e-05
    %v76 = vrsqrt.pop %v75
    %v77 = vmul.f32 %v75, %v76
    %vm78 = vcmp.eq.f32.partialorder %v75, inf
    %v79 = vsel %vm78, %v75, %v77
    %vm80 = vcmp.eq.f32.partialorder %v75, 0.0
    %v81 = vand.u32 %v75, 2147483648
    %v82 = vsel %vm80, %v81, %v79
    %vm83 = vcmask 1043456
    %v84 = vsel %vm83, %v68, 0.0
    %v85 = vrot.slane %v84, 4
    %v86 = vadd.f32 %v84, %v85
    %v87 = vrot.slane %v86, 2
    %v88 = vadd.f32 %v86, %v87
    %v89 = vrot.slane %v88, 1
    %v90 = vadd.f32 %v88, %v89
    %v91 = vrcp.pop 4.0
    %v92 = vmul.f32 %v90, %v91
    %v93 = vsub.f32 %v68, %v92
    %v94 = vmul.f32 %v93, %v93
    %v95 = vadd.f32 %v74, %v94
    %v96 = vsel %vm83, %v95, 0.0
    %v97 = vrot.slane %v96, 4
    %v98 = vadd.f32 %v96, %v97
    %v99 = vrot.slane %v98, 2
    %v100 = vadd.f32 %v98, %v99
    %v101 = vrot.slane %v100, 1
    %v102 = vadd.f32 %v100, %v101
    %v103 = vmul.f32 %v102, %v91
    %v104 = vadd.f32 %v103, 1e-05
    %v105 = vrsqrt.pop %v104
    %v106 = vmul.f32 %v104, %v105
    %vm107 = vcmp.eq.f32.partialorder %v104, inf
    %v108 = vsel %vm107, %v104, %v106
    %vm109 = vcmp.eq.f32.partialorder %v104, 0.0
    %v110 = vand.u32 %v104, 2147483648
    %v111 = vsel %vm109, %v110, %v108
    %113 = vset.pattern.permute.xlu0 0
    %114 = vperm.xlu0 %113, %v46
    %v115 = vpop.permute.xlu0 %114
    %118 = vset.pattern.permute.xlu0 0
    %119 = vperm.xlu0 %118, %v47
    %v120 = vpop.permute.xlu0 %119
    %123 = vset.pattern.permute.xlu0 0
    %124 = vperm.xlu0 %123, %v48
    %v125 = vpop.permute.xlu0 %124
    %128 = vset.pattern.permute.xlu0 0
    %129 = vperm.xlu0 %128, %v49
    %v130 = vpop.permute.xlu0 %129
    %vm132 = vcmask 31744
    %v134 = vsel %vm132, %v42, 0
    %v137 = vsel %vm132, %v43, 0
    %v140 = vsel %vm132, %v44, 0
    %v143 = vsel %vm132, %v45, 0
    %v146 = vsel %vm83, %v63, 0
    %148 = vmatprep.subr.mxu0 0.0
    %149 = vmatpush1.msra.mxu0 %v146
    %150 = vmatprep.subr.mxu0 0.0
    %151 = vmatpush1.msra.mxu0 0.0
    %152 = vmatprep.subr.mxu0 0.0
    %153 = vmatpush1.msra.mxu0 0.0
    %154 = vmatprep.subr.mxu0 0.0
    %155 = vmatpush1.msra.mxu0 0.0
    %156 = vmatprep.subr.mxu0 0.0
    %157 = vmatpush1.msra.mxu0 0.0
    %158 = vmatprep.subr.mxu0 0.0
    %159 = vmatpush1.msra.mxu0 0.0
    %160 = vmatprep.subr.mxu0 0.0
    %161 = vmatpush1.msra.mxu0 0.0
    %162 = vmatprep.subr.mxu0 0.0
    %163 = vmatpush1.msra.mxu0 0.0
    %164 = vmatprep.subr.mxu0 0.0
    %165 = vmatpush1.msra.mxu0 0.0
    %166 = vmatprep.subr.mxu0 0.0
    %167 = vmatpush1.msra.mxu0 0.0
    %168 = vmatprep.subr.mxu0 0.0
    %169 = vmatpush1.msra.mxu0 0.0
    %170 = vmatprep.subr.mxu0 0.0
    %171 = vmatpush1.msra.mxu0 0.0
    %172 = vmatprep.subr.mxu0 0.0
    %173 = vmatpush1.msra.mxu0 0.0
    %174 = vmatprep.subr.mxu0 0.0
    %175 = vmatpush1.msra.mxu0 0.0
    %176 = vmatprep.subr.mxu0 0.0
    %177 = vmatpush1.msra.mxu0 0.0
    %178 = vmatprep.subr.mxu0 0.0
    %179 = vmatpush1.msra.mxu0 0.0
    %180 = vmatprep.subr.mxu0 0.0
    %181 = vmatpush1.msra.mxu0 0.0
    %182 = vmatprep.subr.mxu0 0.0
    %183 = vmatpush1.msra.mxu0 0.0
    %184 = vmatprep.subr.mxu0 0.0
    %185 = vmatpush1.msra.mxu0 0.0
    %186 = vmatprep.subr.mxu0 0.0
    %187 = vmatpush1.msra.mxu0 0.0
    %188 = vmatprep.subr.mxu0 0.0
    %189 = vmatpush1.msra.mxu0 0.0
    %190 = vmatprep.subr.mxu0 0.0
    %191 = vmatpush1.msra.mxu0 0.0
    %192 = vmatprep.subr.mxu0 0.0
    %193 = vmatpush1.msra.mxu0 0.0
    %194 = vmatprep.subr.mxu0 0.0
    %195 = vmatpush1.msra.mxu0 0.0
    %196 = vmatprep.subr.mxu0 0.0
    %197 = vmatpush1.msra.mxu0 0.0
    %198 = vmatprep.subr.mxu0 0.0
    %199 = vmatpush1.msra.mxu0 0.0
    %200 = vmatprep.subr.mxu0 0.0
    %201 = vmatpush1.msra.mxu0 0.0
    %202 = vmatprep.subr.mxu0 0.0
    %203 = vmatpush1.msra.mxu0 0.0
    %204 = vmatprep.subr.mxu0 0.0
    %205 = vmatpush1.msra.mxu0 0.0
    %206 = vmatprep.subr.mxu0 0.0
    %207 = vmatpush1.msra.mxu0 0.0
    %208 = vmatprep.subr.mxu0 0.0
    %209 = vmatpush1.msra.mxu0 0.0
    %210 = vmatprep.subr.mxu0 0.0
    %211 = vmatpush1.msra.mxu0 0.0
    %212 = vmatprep.mubr.f32.mxu0 0.0
    %213 = vmatmul.mubr.f32.gmra.mrb[0].mxu0 %v134
    %v214 = vpop.f32.mrb[0].mxu0
    %v215 = vadd.f32 %v115, %v214
    %v216 = vpop.f32.mrb[0].mxu0
    %217 = vmatprep.mubr.f32.mxu0 0.0
    %218 = vmatmul.mubr.f32.gmra.mrb[0].mxu0 %v137
    %v219 = vpop.f32.mrb[0].mxu0
    %v220 = vadd.f32 %v120, %v219
    %v221 = vpop.f32.mrb[0].mxu0
    %222 = vmatprep.mubr.f32.mxu0 0.0
    %223 = vmatmul.mubr.f32.gmra.mrb[0].mxu0 %v140
    %v224 = vpop.f32.mrb[0].mxu0
    %v225 = vadd.f32 %v125, %v224
    %v226 = vpop.f32.mrb[0].mxu0
    %227 = vmatprep.mubr.f32.mxu0 0.0
    %228 = vmatmul.mubr.f32.gmra.mrb[0].mxu0 %v143
    %v229 = vpop.f32.mrb[0].mxu0
    %v230 = vadd.f32 %v130, %v229
    %v231 = vpop.f32.mrb[0].mxu0
    %232 = vdwg.mxu0
    %v233 = vmax.f32 %v215, 0.0
    %v234 = vmax.f32 %v220, 0.0
    %v235 = vmax.f32 %v225, 0.0
    %v236 = vmax.f32 %v230, 0.0
    %238 = vset.pattern.permute.xlu0 0
    %239 = vperm.xlu0 %238, %v51
    %v240 = vpop.permute.xlu0 %239
    %vm242 = vcmask 261120
    %v244 = vsel %vm242, %v50, 0
    %246 = vmatprep.subr.mxu0 0.0
    %247 = vmatpush1.msra.mxu0 %v233
    %248 = vmatprep.subr.mxu0 0.0
    %249 = vmatpush1.msra.mxu0 %v234
    %250 = vmatprep.subr.mxu0 0.0
    %251 = vmatpush1.msra.mxu0 %v235
    %252 = vmatprep.subr.mxu0 0.0
    %253 = vmatpush1.msra.mxu0 %v236
    %254 = vmatprep.subr.mxu0 0.0
    %255 = vmatpush1.msra.mxu0 0.0
    %256 = vmatprep.subr.mxu0 0.0
    %257 = vmatpush1.msra.mxu0 0.0
    %258 = vmatprep.subr.mxu0 0.0
    %259 = vmatpush1.msra.mxu0 0.0
    %260 = vmatprep.subr.mxu0 0.0
    %261 = vmatpush1.msra.mxu0 0.0
    %262 = vmatprep.subr.mxu0 0.0
    %263 = vmatpush1.msra.mxu0 0.0
    %264 = vmatprep.subr.mxu0 0.0
    %265 = vmatpush1.msra.mxu0 0.0
    %266 = vmatprep.subr.mxu0 0.0
    %267 = vmatpush1.msra.mxu0 0.0
    %268 = vmatprep.subr.mxu0 0.0
    %269 = vmatpush1.msra.mxu0 0.0
    %270 = vmatprep.subr.mxu0 0.0
    %271 = vmatpush1.msra.mxu0 0.0
    %272 = vmatprep.subr.mxu0 0.0
    %273 = vmatpush1.msra.mxu0 0.0
    %274 = vmatprep.subr.mxu0 0.0
    %275 = vmatpush1.msra.mxu0 0.0
    %276 = vmatprep.subr.mxu0 0.0
    %277 = vmatpush1.msra.mxu0 0.0
    %278 = vmatprep.subr.mxu0 0.0
    %279 = vmatpush1.msra.mxu0 0.0
    %280 = vmatprep.subr.mxu0 0.0
    %281 = vmatpush1.msra.mxu0 0.0
    %282 = vmatprep.subr.mxu0 0.0
    %283 = vmatpush1.msra.mxu0 0.0
    %284 = vmatprep.subr.mxu0 0.0
    %285 = vmatpush1.msra.mxu0 0.0
    %286 = vmatprep.subr.mxu0 0.0
    %287 = vmatpush1.msra.mxu0 0.0
    %288 = vmatprep.subr.mxu0 0.0
    %289 = vmatpush1.msra.mxu0 0.0
    %290 = vmatprep.subr.mxu0 0.0
    %291 = vmatpush1.msra.mxu0 0.0
    %292 = vmatprep.subr.mxu0 0.0
    %293 = vmatpush1.msra.mxu0 0.0
    %294 = vmatprep.subr.mxu0 0.0
    %295 = vmatpush1.msra.mxu0 0.0
    %296 = vmatprep.subr.mxu0 0.0
    %297 = vmatpush1.msra.mxu0 0.0
    %298 = vmatprep.subr.mxu0 0.0
    %299 = vmatpush1.msra.mxu0 0.0
    %300 = vmatprep.subr.mxu0 0.0
    %301 = vmatpush1.msra.mxu0 0.0
    %302 = vmatprep.subr.mxu0 0.0
    %303 = vmatpush1.msra.mxu0 0.0
    %304 = vmatprep.subr.mxu0 0.0
    %305 = vmatpush1.msra.mxu0 0.0
    %306 = vmatprep.subr.mxu0 0.0
    %307 = vmatpush1.msra.mxu0 0.0
    %308 = vmatprep.subr.mxu0 0.0
    %309 = vmatpush1.msra.mxu0 0.0
    %310 = vmatprep.mubr.f32.mxu0 0.0
    %311 = vmatmul.mubr.f32.gmra.mrb[0].mxu0 %v244
    %v312 = vpop.f32.mrb[0].mxu0
    %v313 = vadd.f32 %v240, %v312
    %v314 = vpop.f32.mrb[0].mxu0
    %315 = vdwg.mxu0
    %v316 = vxor.u32 %v313, 2147483648
    %v317 = vmul.f32 %v316, 1.442695
    %v318 = vpow.pop %v317
    %v319 = vadd.f32 %v318, 1.0
    %v320 = vrcp.pop %v319
    %v321 = vmul.f32 1.0, %v320
    %v322 = vsel %vm64, %v321, 0.0
    %323 = vadd.xlane.f32.xlu0 %v322
    %v324 = vpop.xlane.xlu0 %323
    %v325 = vmul.f32 %v324, 0.0625
    %v326 = vmul.f32 %v325, %v68
    %v327 = vsub.f32 1.0, %v325
    %v328 = vmul.f32 %v327, %v92
    %v329 = vadd.f32 %v326, %v328
    %v330 = vmul.f32 %v325, %v82
    %v331 = vmul.f32 %v327, %v111
    %v332 = vadd.f32 %v330, %v331
    %v333 = vrcp.pop %v332
    %v334 = vmul.f32 %v332, %v333
    %v335 = vsub.f32 2.0, %v334
    %v336 = vmul.f32 %v333, %v335
    %v337 = vsub.f32 %v62, %v329
    %v338 = vmul.f32 %v337, %v336
    %v339 = vsel %vm64, %v63, 0.0
    %340 = vadd.xlane.f32.xlu0 %v339
    %v341 = vpop.xlane.xlu0 %340
    %v342 = vmul.f32 %v341, 0.0625
    %v343 = vmul.f32 %v52, %v342
    %vm344 = vcmask 257024
    %v345 = vsel %vm344, %v343, 0.0
    %v346 = vrot.slane %v345, 4
    %v347 = vadd.f32 %v345, %v346
    %v348 = vrot.slane %v347, 2
    %v349 = vadd.f32 %v347, %v348
    %v350 = vrot.slane %v349, 1
    %v351 = vadd.f32 %v349, %v350
    %v352 = vadd.f32 %v351, %v53
    %v353 = vmax.f32 %v352, 0.0
    %v354 = vlaneseq
    %v355 = vshrl.u32 %v354, 7
    %v356 = vsub.s32 0, %v355
    %v357 = vrot.slane %v353, %v356
    %v358 = vmul.f32 %v54, %v357
    %v359 = vsel %vm344, %v358, 0.0
    %360 = vadd.xlane.f32.xlu0 %v359
    %v361 = vpop.xlane.xlu0 %360
    %v362 = vadd.f32 %v361, %v55
    %v363 = vmul.f32 %v56, %v357
    %v364 = vsel %vm344, %v363, 0.0
    %365 = vadd.xlane.f32.xlu0 %v364
    %v366 = vpop.xlane.xlu0 %365
    %v367 = vadd.f32 %v366, %v57
    %v368 = vadd.f32 %v362, 1.0
    %370 = vset.pattern.permute.xlu0 0
    %371 = vperm.xlu0 %370, %v368
    %v372 = vpop.permute.xlu0 %371
    %v374 = vmul.f32 %v372, %v338
    %376 = vset.pattern.permute.xlu0 0
    %377 = vperm.xlu0 %376, %v367
    %v378 = vpop.permute.xlu0 %377
    %v380 = vadd.f32 %v374, %v378
    %v381 = vand.u32 2147483647, %v380
    %v382 = vsel %vm64, %v381, 0.0
    %383 = vadd.xlane.f32.xlu0 %v382
    %v384 = vpop.xlane.xlu0 %383
    %v385 = vmul.f32 %v384, 0.0625
    %386 = vxpose.xlu0.b32.start [1/16] %v385, 128
    %387 = vxpose.xlu0.b32.cont [2/16] 0.0, 128
    %388 = vxpose.xlu0.b32.cont [3/16] 0.0, 128
    %389 = vxpose.xlu0.b32.cont [4/16] 0.0, 128
    %390 = vxpose.xlu0.b32.cont [5/16] 0.0, 128
    %391 = vxpose.xlu0.b32.cont [6/16] 0.0, 128
    %392 = vxpose.xlu0.b32.cont [7/16] 0.0, 128
    %393 = vxpose.xlu0.b32.cont [8/16] 0.0, 128
    %394 = vxpose.xlu0.b32.cont [9/16] 0.0, 128
    %395 = vxpose.xlu0.b32.cont [10/16] 0.0, 128
    %396 = vxpose.xlu0.b32.cont [11/16] 0.0, 128
    %397 = vxpose.xlu0.b32.cont [12/16] 0.0, 128
    %398 = vxpose.xlu0.b32.cont [13/16] 0.0, 128
    %399 = vxpose.xlu0.b32.cont [14/16] 0.0, 128
    %400 = vxpose.xlu0.b32.cont [15/16] 0.0, 128
    %401 = vxpose.xlu0.b32.end [16/16] 0.0, 128
    %v402 = vpop.trf.xlu0
    %v403 = vpop.trf.xlu0
    %v404 = vpop.trf.xlu0
    %v405 = vpop.trf.xlu0
    %v406 = vpop.trf.xlu0
    %v407 = vpop.trf.xlu0
    %v408 = vpop.trf.xlu0
    %v409 = vpop.trf.xlu0
    %v410 = vpop.trf.xlu0
    %v411 = vpop.trf.xlu0
    %v412 = vpop.trf.xlu0
    %v413 = vpop.trf.xlu0
    %v414 = vpop.trf.xlu0
    %v415 = vpop.trf.xlu0
    %v416 = vpop.trf.xlu0
    %v417 = vpop.trf.xlu0
    %v418 = vlaneseq
    %v419 = vshrl.u32 %v418, 7
    %v420 = vsub.s32 0, %v419
    %v421 = vrot.slane %v402, %v420
    %vm422 = vcmp.gt.f32.partialorder %v421, %v385
    %vm423 = vcmp.eq.f32.partialorder %v421, %v385
    %vm424 = vcmp.lt.s32.totalorder %v61, %v59
    %vm425 = vmand %vm423, %vm424
    %vm426 = vmor %vm422, %vm425
    %v427 = vsel %vm426, 1, 0
    %vm428 = vcmask 27648
    %v429 = vsel %vm428, %v427, 0
    %v430 = vand.u32 %v429, 65535
    %v431 = vshrl.u32 %v429, 16
    %v432 = vcvt.s32.f32 %v430
    %v433 = vcvt.s32.f32 %v431
    %434 = vadd.xlane.f32.xlu0 %v432
    %v435 = vpop.xlane.xlu0 %434
    %436 = vadd.xlane.f32.xlu0 %v433
    %v437 = vpop.xlane.xlu0 %436
    %v438 = vcvt.f32.s32 %v435
    %v439 = vcvt.f32.s32 %v437
    %v440 = vshll.u32 %v439, 16
    %v441 = vadd.s32 %v440, %v438
    %vm442 = vcmp.lt.s32.totalorder %v441, 2
    %v443 = vsel %vm442, 1, 0
    %v444 = vcvt.s32.f32 %v443
    %v445 = vmul.f32 %v380, %v444
    %446 = vst.msk [vmem:[#allocation2] sm:$0xf] %vm64, %v445
    %s447 = scalar_lea.vmem %s0, 4
    %v448 = vld [vmem:[%s447] sm:$0xf]
    %s449 = scalar_lea.vmem %s1, 4
    %v450 = vld [vmem:[%s449] sm:$0xf]
    %v451 = vsel %vm64, %v448, 0.0
    %452 = vadd.xlane.f32.xlu0 %v451
    %v453 = vpop.xlane.xlu0 %452
    %v454 = vmul.f32 %v453, 0.0625
    %v455 = vsub.f32 %v448, %v454
    %v456 = vmul.f32 %v455, %v455
    %v457 = vsel %vm64, %v456, 0.0
    %458 = vadd.xlane.f32.xlu0 %v457
    %v459 = vpop.xlane.xlu0 %458
    %v460 = vmul.f32 %v459, 0.0625
    %v461 = vadd.f32 %v460, 1e-05
    %v462 = vrsqrt.pop %v461
    %v463 = vmul.f32 %v461, %v462
    %vm464 = vcmp.eq.f32.partialorder %v461, inf
    %v465 = vsel %vm464, %v461, %v463
    %vm466 = vcmp.eq.f32.partialorder %v461, 0.0
    %v467 = vand.u32 %v461, 2147483648
    %v468 = vsel %vm466, %v467, %v465
    %v469 = vsel %vm83, %v454, 0.0
    %v470 = vrot.slane %v469, 4
    %v471 = vadd.f32 %v469, %v470
    %v472 = vrot.slane %v471, 2
    %v473 = vadd.f32 %v471, %v472
    %v474 = vrot.slane %v473, 1
    %v475 = vadd.f32 %v473, %v474
    %v476 = vmul.f32 %v475, %v91
    %v477 = vsub.f32 %v454, %v476
    %v478 = vmul.f32 %v477, %v477
    %v479 = vadd.f32 %v460, %v478
    %v480 = vsel %vm83, %v479, 0.0
    %v481 = vrot.slane %v480, 4
    %v482 = vadd.f32 %v480, %v481
    %v483 = vrot.slane %v482, 2
    %v484 = vadd.f32 %v482, %v483
    %v485 = vrot.slane %v484, 1
    %v486 = vadd.f32 %v484, %v485
    %v487 = vmul.f32 %v486, %v91
    %v488 = vadd.f32 %v487, 1e-05
    %v489 = vrsqrt.pop %v488
    %v490 = vmul.f32 %v488, %v489
    %vm491 = vcmp.eq.f32.partialorder %v488, inf
    %v492 = vsel %vm491, %v488, %v490
    %vm493 = vcmp.eq.f32.partialorder %v488, 0.0
    %v494 = vand.u32 %v488, 2147483648
    %v495 = vsel %vm493, %v494, %v492
    %v497 = vsel %vm83, %v450, 0
    %499 = vmatprep.subr.mxu0 0.0
    %500 = vmatpush1.msra.mxu0 %v497
    %501 = vmatprep.subr.mxu0 0.0
    %502 = vmatpush1.msra.mxu0 0.0
    %503 = vmatprep.subr.mxu0 0.0
    %504 = vmatpush1.msra.mxu0 0.0
    %505 = vmatprep.subr.mxu0 0.0
    %506 = vmatpush1.msra.mxu0 0.0
    %507 = vmatprep.subr.mxu0 0.0
    %508 = vmatpush1.msra.mxu0 0.0
    %509 = vmatprep.subr.mxu0 0.0
    %510 = vmatpush1.msra.mxu0 0.0
    %511 = vmatprep.subr.mxu0 0.0
    %512 = vmatpush1.msra.mxu0 0.0
    %513 = vmatprep.subr.mxu0 0.0
    %514 = vmatpush1.msra.mxu0 0.0
    %515 = vmatprep.subr.mxu0 0.0
    %516 = vmatpush1.msra.mxu0 0.0
    %517 = vmatprep.subr.mxu0 0.0
    %518 = vmatpush1.msra.mxu0 0.0
    %519 = vmatprep.subr.mxu0 0.0
    %520 = vmatpush1.msra.mxu0 0.0
    %521 = vmatprep.subr.mxu0 0.0
    %522 = vmatpush1.msra.mxu0 0.0
    %523 = vmatprep.subr.mxu0 0.0
    %524 = vmatpush1.msra.mxu0 0.0
    %525 = vmatprep.subr.mxu0 0.0
    %526 = vmatpush1.msra.mxu0 0.0
    %527 = vmatprep.subr.mxu0 0.0
    %528 = vmatpush1.msra.mxu0 0.0
    %529 = vmatprep.subr.mxu0 0.0
    %530 = vmatpush1.msra.mxu0 0.0
    %531 = vmatprep.subr.mxu0 0.0
    %532 = vmatpush1.msra.mxu0 0.0
    %533 = vmatprep.subr.mxu0 0.0
    %534 = vmatpush1.msra.mxu0 0.0
    %535 = vmatprep.subr.mxu0 0.0
    %536 = vmatpush1.msra.mxu0 0.0
    %537 = vmatprep.subr.mxu0 0.0
    %538 = vmatpush1.msra.mxu0 0.0
    %539 = vmatprep.subr.mxu0 0.0
    %540 = vmatpush1.msra.mxu0 0.0
    %541 = vmatprep.subr.mxu0 0.0
    %542 = vmatpush1.msra.mxu0 0.0
    %543 = vmatprep.subr.mxu0 0.0
    %544 = vmatpush1.msra.mxu0 0.0
    %545 = vmatprep.subr.mxu0 0.0
    %546 = vmatpush1.msra.mxu0 0.0
    %547 = vmatprep.subr.mxu0 0.0
    %548 = vmatpush1.msra.mxu0 0.0
    %549 = vmatprep.subr.mxu0 0.0
    %550 = vmatpush1.msra.mxu0 0.0
    %551 = vmatprep.subr.mxu0 0.0
    %552 = vmatpush1.msra.mxu0 0.0
    %553 = vmatprep.subr.mxu0 0.0
    %554 = vmatpush1.msra.mxu0 0.0
    %555 = vmatprep.subr.mxu0 0.0
    %556 = vmatpush1.msra.mxu0 0.0
    %557 = vmatprep.subr.mxu0 0.0
    %558 = vmatpush1.msra.mxu0 0.0
    %559 = vmatprep.subr.mxu0 0.0
    %560 = vmatpush1.msra.mxu0 0.0
    %561 = vmatprep.subr.mxu0 0.0
    %562 = vmatpush1.msra.mxu0 0.0
    %563 = vmatprep.mubr.f32.mxu0 0.0
    %564 = vmatmul.mubr.f32.gmra.mrb[0].mxu0 %v134
    %v565 = vpop.f32.mrb[0].mxu0
    %v566 = vadd.f32 %v115, %v565
    %v567 = vpop.f32.mrb[0].mxu0
    %568 = vmatprep.mubr.f32.mxu0 0.0
    %569 = vmatmul.mubr.f32.gmra.mrb[0].mxu0 %v137
    %v570 = vpop.f32.mrb[0].mxu0
    %v571 = vadd.f32 %v120, %v570
    %v572 = vpop.f32.mrb[0].mxu0
    %573 = vmatprep.mubr.f32.mxu0 0.0
    %574 = vmatmul.mubr.f32.gmra.mrb[0].mxu0 %v140
    %v575 = vpop.f32.mrb[0].mxu0
    %v576 = vadd.f32 %v125, %v575
    %v577 = vpop.f32.mrb[0].mxu0
    %578 = vmatprep.mubr.f32.mxu0 0.0
    %579 = vmatmul.mubr.f32.gmra.mrb[0].mxu0 %v143
    %v580 = vpop.f32.mrb[0].mxu0
    %v581 = vadd.f32 %v130, %v580
    %v582 = vpop.f32.mrb[0].mxu0
    %583 = vdwg.mxu0
    %v584 = vmax.f32 %v566, 0.0
    %v585 = vmax.f32 %v571, 0.0
    %v586 = vmax.f32 %v576, 0.0
    %v587 = vmax.f32 %v581, 0.0
    %588 = vmatprep.subr.mxu0 0.0
    %589 = vmatpush1.msra.mxu0 %v584
    %590 = vmatprep.subr.mxu0 0.0
    %591 = vmatpush1.msra.mxu0 %v585
    %592 = vmatprep.subr.mxu0 0.0
    %593 = vmatpush1.msra.mxu0 %v586
    %594 = vmatprep.subr.mxu0 0.0
    %595 = vmatpush1.msra.mxu0 %v587
    %596 = vmatprep.subr.mxu0 0.0
    %597 = vmatpush1.msra.mxu0 0.0
    %598 = vmatprep.subr.mxu0 0.0
    %599 = vmatpush1.msra.mxu0 0.0
    %600 = vmatprep.subr.mxu0 0.0
    %601 = vmatpush1.msra.mxu0 0.0
    %602 = vmatprep.subr.mxu0 0.0
    %603 = vmatpush1.msra.mxu0 0.0
    %604 = vmatprep.subr.mxu0 0.0
    %605 = vmatpush1.msra.mxu0 0.0
    %606 = vmatprep.subr.mxu0 0.0
    %607 = vmatpush1.msra.mxu0 0.0
    %608 = vmatprep.subr.mxu0 0.0
    %609 = vmatpush1.msra.mxu0 0.0
    %610 = vmatprep.subr.mxu0 0.0
    %611 = vmatpush1.msra.mxu0 0.0
    %612 = vmatprep.subr.mxu0 0.0
    %613 = vmatpush1.msra.mxu0 0.0
    %614 = vmatprep.subr.mxu0 0.0
    %615 = vmatpush1.msra.mxu0 0.0
    %616 = vmatprep.subr.mxu0 0.0
    %617 = vmatpush1.msra.mxu0 0.0
    %618 = vmatprep.subr.mxu0 0.0
    %619 = vmatpush1.msra.mxu0 0.0
    %620 = vmatprep.subr.mxu0 0.0
    %621 = vmatpush1.msra.mxu0 0.0
    %622 = vmatprep.subr.mxu0 0.0
    %623 = vmatpush1.msra.mxu0 0.0
    %624 = vmatprep.subr.mxu0 0.0
    %625 = vmatpush1.msra.mxu0 0.0
    %626 = vmatprep.subr.mxu0 0.0
    %627 = vmatpush1.msra.mxu0 0.0
    %628 = vmatprep.subr.mxu0 0.0
    %629 = vmatpush1.msra.mxu0 0.0
    %630 = vmatprep.subr.mxu0 0.0
    %631 = vmatpush1.msra.mxu0 0.0
    %632 = vmatprep.subr.mxu0 0.0
    %633 = vmatpush1.msra.mxu0 0.0
    %634 = vmatprep.subr.mxu0 0.0
    %635 = vmatpush1.msra.mxu0 0.0
    %636 = vmatprep.subr.mxu0 0.0
    %637 = vmatpush1.msra.mxu0 0.0
    %638 = vmatprep.subr.mxu0 0.0
    %639 = vmatpush1.msra.mxu0 0.0
    %640 = vmatprep.subr.mxu0 0.0
    %641 = vmatpush1.msra.mxu0 0.0
    %642 = vmatprep.subr.mxu0 0.0
    %643 = vmatpush1.msra.mxu0 0.0
    %644 = vmatprep.subr.mxu0 0.0
    %645 = vmatpush1.msra.mxu0 0.0
    %646 = vmatprep.subr.mxu0 0.0
    %647 = vmatpush1.msra.mxu0 0.0
    %648 = vmatprep.subr.mxu0 0.0
    %649 = vmatpush1.msra.mxu0 0.0
    %650 = vmatprep.subr.mxu0 0.0
    %651 = vmatpush1.msra.mxu0 0.0
    %652 = vmatprep.mubr.f32.mxu0 0.0
    %653 = vmatmul.mubr.f32.gmra.mrb[0].mxu0 %v244
    %v654 = vpop.f32.mrb[0].mxu0
    %v655 = vadd.f32 %v240, %v654
    %v656 = vpop.f32.mrb[0].mxu0
    %657 = vdwg.mxu0
    %v658 = vxor.u32 %v655, 2147483648
    %v659 = vmul.f32 %v658, 1.442695
    %v660 = vpow.pop %v659
    %v661 = vadd.f32 %v660, 1.0
    %v662 = vrcp.pop %v661
    %v663 = vmul.f32 1.0, %v662
    %v664 = vsel %vm64, %v663, 0.0
    %665 = vadd.xlane.f32.xlu0 %v664
    %v666 = vpop.xlane.xlu0 %665
    %v667 = vmul.f32 %v666, 0.0625
    %v668 = vmul.f32 %v667, %v454
    %v669 = vsub.f32 1.0, %v667
    %v670 = vmul.f32 %v669, %v476
    %v671 = vadd.f32 %v668, %v670
    %v672 = vmul.f32 %v667, %v468
    %v673 = vmul.f32 %v669, %v495
    %v674 = vadd.f32 %v672, %v673
    %v675 = vrcp.pop %v674
    %v676 = vmul.f32 %v674, %v675
    %v677 = vsub.f32 2.0, %v676
    %v678 = vmul.f32 %v675, %v677
    %v679 = vsub.f32 %v448, %v671
    %v680 = vmul.f32 %v679, %v678
    %v681 = vsel %vm64, %v450, 0.0
    %682 = vadd.xlane.f32.xlu0 %v681
    %v683 = vpop.xlane.xlu0 %682
    %v684 = vmul.f32 %v683, 0.0625
    %v685 = vmul.f32 %v52, %v684
    %v686 = vsel %vm344, %v685, 0.0
    %v687 = vrot.slane %v686, 4
    %v688 = vadd.f32 %v686, %v687
    %v689 = vrot.slane %v688, 2
    %v690 = vadd.f32 %v688, %v689
    %v691 = vrot.slane %v690, 1
    %v692 = vadd.f32 %v690, %v691
    %v693 = vadd.f32 %v692, %v53
    %v694 = vmax.f32 %v693, 0.0
    %v695 = vlaneseq
    %v696 = vshrl.u32 %v695, 7
    %v697 = vsub.s32 0, %v696
    %v698 = vrot.slane %v694, %v697
    %v699 = vmul.f32 %v54, %v698
    %v700 = vsel %vm344, %v699, 0.0
    %701 = vadd.xlane.f32.xlu0 %v700
    %v702 = vpop.xlane.xlu0 %701
    %v703 = vadd.f32 %v702, %v55
    %v704 = vmul.f32 %v56, %v698
    %v705 = vsel %vm344, %v704, 0.0
    %706 = vadd.xlane.f32.xlu0 %v705
    %v707 = vpop.xlane.xlu0 %706
    %v708 = vadd.f32 %v707, %v57
    %v709 = vadd.f32 %v703, 1.0
    %711 = vset.pattern.permute.xlu0 0
    %712 = vperm.xlu0 %711, %v709
    %v713 = vpop.permute.xlu0 %712
    %v715 = vmul.f32 %v713, %v680
    %717 = vset.pattern.permute.xlu0 0
    %718 = vperm.xlu0 %717, %v708
    %v719 = vpop.permute.xlu0 %718
    %v721 = vadd.f32 %v715, %v719
    %v722 = vand.u32 2147483647, %v721
    %v723 = vsel %vm64, %v722, 0.0
    %724 = vadd.xlane.f32.xlu0 %v723
    %v725 = vpop.xlane.xlu0 %724
    %v726 = vmul.f32 %v725, 0.0625
    %727 = vxpose.xlu0.b32.start [1/16] %v726, 128
    %728 = vxpose.xlu0.b32.cont [2/16] 0.0, 128
    %729 = vxpose.xlu0.b32.cont [3/16] 0.0, 128
    %730 = vxpose.xlu0.b32.cont [4/16] 0.0, 128
    %731 = vxpose.xlu0.b32.cont [5/16] 0.0, 128
    %732 = vxpose.xlu0.b32.cont [6/16] 0.0, 128
    %733 = vxpose.xlu0.b32.cont [7/16] 0.0, 128
    %734 = vxpose.xlu0.b32.cont [8/16] 0.0, 128
    %735 = vxpose.xlu0.b32.cont [9/16] 0.0, 128
    %736 = vxpose.xlu0.b32.cont [10/16] 0.0, 128
    %737 = vxpose.xlu0.b32.cont [11/16] 0.0, 128
    %738 = vxpose.xlu0.b32.cont [12/16] 0.0, 128
    %739 = vxpose.xlu0.b32.cont [13/16] 0.0, 128
    %740 = vxpose.xlu0.b32.cont [14/16] 0.0, 128
    %741 = vxpose.xlu0.b32.cont [15/16] 0.0, 128
    %742 = vxpose.xlu0.b32.end [16/16] 0.0, 128
    %v743 = vpop.trf.xlu0
    %v744 = vpop.trf.xlu0
    %v745 = vpop.trf.xlu0
    %v746 = vpop.trf.xlu0
    %v747 = vpop.trf.xlu0
    %v748 = vpop.trf.xlu0
    %v749 = vpop.trf.xlu0
    %v750 = vpop.trf.xlu0
    %v751 = vpop.trf.xlu0
    %v752 = vpop.trf.xlu0
    %v753 = vpop.trf.xlu0
    %v754 = vpop.trf.xlu0
    %v755 = vpop.trf.xlu0
    %v756 = vpop.trf.xlu0
    %v757 = vpop.trf.xlu0
    %v758 = vpop.trf.xlu0
    %v759 = vlaneseq
    %v760 = vshrl.u32 %v759, 7
    %v761 = vsub.s32 0, %v760
    %v762 = vrot.slane %v743, %v761
    %vm763 = vcmp.gt.f32.partialorder %v762, %v726
    %vm764 = vcmp.eq.f32.partialorder %v762, %v726
    %vm765 = vmand %vm764, %vm424
    %vm766 = vmor %vm763, %vm765
    %v767 = vsel %vm766, 1, 0
    %v768 = vsel %vm428, %v767, 0
    %v769 = vand.u32 %v768, 65535
    %v770 = vshrl.u32 %v768, 16
    %v771 = vcvt.s32.f32 %v769
    %v772 = vcvt.s32.f32 %v770
    %773 = vadd.xlane.f32.xlu0 %v771
    %v774 = vpop.xlane.xlu0 %773
    %775 = vadd.xlane.f32.xlu0 %v772
    %v776 = vpop.xlane.xlu0 %775
    %v777 = vcvt.f32.s32 %v774
    %v778 = vcvt.f32.s32 %v776
    %v779 = vshll.u32 %v778, 16
    %v780 = vadd.s32 %v779, %v777
    %vm781 = vcmp.lt.s32.totalorder %v780, 2
    %v782 = vsel %vm781, 1, 0
    %v783 = vcvt.s32.f32 %v782
    %v784 = vmul.f32 %v721, %v783
    %s785 = scalar_lea.vmem [#allocation2], 4
    %786 = vst.msk [vmem:[%s785] sm:$0xf] %vm64, %v784
    // Predicated region
    $region50: #{tpu_custom_call.1} parent=1 // pred_check
      _
    $region51: #{tpu_custom_call.1} parent=1 // pred_check_branch
      %788 = sbr.rel (0) target = $region53
    $region52: #{tpu_custom_call.1} parent=1 // pred_region
      %s790 = ssub.s32 128, 128
      %791 = vsyncadd [#allocation3], %s790
      %s792 = sshll.u32 [#allocation2], 4
      %s793 = int_to_ptr.vmem [resolvable:$true] %s792
      %798 = dma.vmem_to_hbm [thread:$0]  %s793, 128, %s12, [#allocation3], 64, 64, 4
    $region53: #{tpu_custom_call.1} parent=1 // pred_fallthru
      _
    // Predicated region
    $region54: #{tpu_custom_call.1} parent=1 // pred_check
      _
    $region55: #{tpu_custom_call.1} parent=1 // pred_check_branch
      %800 = sbr.rel (0) target = $region57
    $region56: #{tpu_custom_call.1} parent=1 // pred_region
      %801 = dma.done [#allocation3], 128
    $region57: #{tpu_custom_call.1} parent=1 // pred_fallthru
      _
    %802 = vsyncpa [#allocation3], 1

</llo_original>
